<compile_context>
chip_gen: v7x
topology: tpu7x:2x2x1
jax: 0.10.0
libtpu: 0.0.40
codegen_flags: <defaults>
</compile_context>

<pallas_src>
import numpy as np
import jax
import jax.numpy as jnp
from jax import lax
from jax.experimental import pallas as pl
from jax.experimental.pallas import tpu as pltpu


_TARGET_BLOCK_BYTES = 8 * 1024 * 1024   # ~8 MiB input blocks (v6e/v7x sweet spot)
_VMEM_LIMIT_BYTES = 40 * 1024 * 1024    # 2x8 MiB double-buffered input + temps
_MIN_PALLAS_ELEMS = 1024                # smaller params: plain-JAX fallback


def _largest_lane_group(c):
    """Largest divisor of c that is <= 128 (128 whenever c % 128 == 0)."""
    if c % 128 == 0:
        return 128
    for g in range(min(c, 128), 0, -1):
        if c % g == 0:
            return g
    return 1


def _pick_rows(m, c, itemsize, align):
    """Rows per block: multiple of `align`, ~8 MiB blocks, >=2 blocks when possible."""
    r = _TARGET_BLOCK_BYTES // max(1, c * itemsize)
    r = max(align, (r // align) * align)
    if m >= 2 * align:                              # allow a 2-way split (v7x megacore)
        half = -(-m // 2)
        r = min(r, ((half + align - 1) // align) * align)
    r = min(r, max(align, (m // align) * align))    # never exceed the row count
    return r


def _make_sumsq_kernel(rows, cols, group, total_rows):
    """o[0,0,l] = sum over this row block of sum_k x[r, k*group + l]^2 (f32)."""
    n_groups = cols // group
    ragged = (total_rows % rows) != 0

    def kernel(x_ref, o_ref):
        if n_groups == 1:
            g = x_ref[...].astype(jnp.float32)
            acc = g * g
        elif group == 128:
            # Aligned 128-lane groups read straight from the ref:
            # no full-tile f32 / squared temporaries, pure VALU per step.
            def body(k, acc):
                start = pl.multiple_of(k * 128, 128)
                g = x_ref[:, pl.ds(start, 128)].astype(jnp.float32)
                return acc + g * g

            acc = lax.fori_loop(0, n_groups, body,
                                jnp.zeros((rows, 128), jnp.float32),
                                unroll=min(n_groups, 8))
        else:
            # Odd (non-128-multiple) last dims: a few static lane groups.
            acc = jnp.zeros((rows, group), jnp.float32)
            for k in range(n_groups):
                g = x_ref[:, k * group:(k + 1) * group].astype(jnp.float32)
                acc = acc + g * g

        if ragged:
            # Last block reads past the real rows (unspecified data); zero those
            # rows once at the end (row-wise independence makes this exact).
            pid = pl.program_id(0)
            row_ids = pid * rows + lax.broadcasted_iota(jnp.int32, (rows, group), 0)
            acc = jnp.where(row_ids < total_rows, acc, 0.0)

        o_ref[...] = jnp.sum(acc, axis=0, keepdims=True).reshape(1, 1, group)

    return kernel


def _param_sum_sq(p):
    """f32 scalar sum of squares of one parameter (Pallas when worthwhile)."""
    if not jnp.issubdtype(p.dtype, jnp.floating):
        p = p.astype(jnp.float32)
    n_elems = int(np.prod(p.shape)) if p.ndim else 1

    if p.ndim == 2:
        p2 = p                              # stream straight from HBM, no copy
    elif p.ndim > 2:
        p2 = p.reshape(p.shape[0], -1)      # collapse trailing dims into lanes
    else:
        p2 = None

    use_pallas = p2 is not None and n_elems >= _MIN_PALLAS_ELEMS
    if use_pallas:
        m, c = int(p2.shape[0]), int(p2.shape[1])
        itemsize = jnp.dtype(p2.dtype).itemsize
        align = 8 * max(1, 4 // itemsize)   # sublane packing: 8 (f32) / 16 (bf16)
        group = _largest_lane_group(c)
        n_groups = c // group
        # Pathological shapes (too few rows to tile, huge prime-ish last dim, or
        # a single min-size block that would blow VMEM) -> plain JAX, which is
        # already a single HBM-bound pass for those.
        if (m < align
                or (group != 128 and n_groups > 64)
                or align * c * itemsize > (16 << 20)):
            use_pallas = False

    if not use_pallas:
        return jnp.sum(jnp.square(p.astype(jnp.float32)))

    rows = _pick_rows(m, c, itemsize, align)
    n_blocks = -(-m // rows)

    partials = pl.pallas_call(
        _make_sumsq_kernel(rows, c, group, m),
        out_shape=jax.ShapeDtypeStruct((n_blocks, 1, group), jnp.float32),
        grid=(n_blocks,),
        in_specs=[pl.BlockSpec((rows, c), lambda i: (i, 0))],
        out_specs=pl.BlockSpec((1, 1, group), lambda i: (i, 0, 0)),
        compiler_params=pltpu.CompilerParams(
            dimension_semantics=("parallel",),   # free 2-TC split on v7x
            vmem_limit_bytes=_VMEM_LIMIT_BYTES,
        ),
    )(p2)
    return jnp.sum(partials)


def get_regularization_loss(params, loss_weight):
    """params: list of jnp arrays (trainable parameters). Returns f32 scalar."""
    if len(params) == 0:
        return jnp.float32(0.0)
    sum_sqs = jnp.stack([_param_sum_sq(p) for p in params])
    norms = jnp.sqrt(sum_sqs)                     # per-parameter L2 norms
    return jnp.asarray(loss_weight, jnp.float32) * jnp.sum(norms)


if __name__ == "__main__":
    # Deterministic synthetic "model" parameters (all requires_grad=True).
    key = jax.random.PRNGKey(0)
    k1, k2, k3, k4, k5 = jax.random.split(key, 5)
    params = [
        jax.random.normal(k1, (32, 64), jnp.float32),     # weight 1 (Pallas path)
        jax.random.normal(k2, (64,), jnp.float32),        # bias 1   (plain-JAX path)
        jax.random.normal(k3, (64, 16), jnp.float32),     # weight 2 (Pallas path)
        jax.random.normal(k4, (16,), jnp.float32),        # bias 2   (plain-JAX path)
        jax.random.normal(k5, (200, 384), jnp.bfloat16),  # bf16 weight, ragged rows
    ]
    loss_weight = 0.01

    result = jax.block_until_ready(get_regularization_loss(params, loss_weight))

    # Pure-JAX reference (matches torch: sum of per-parameter L2 norms * weight)
    ref = loss_weight * sum(
        jnp.sqrt(jnp.sum(jnp.square(p.astype(jnp.float32)))) for p in params
    )

    assert jnp.allclose(result, ref, rtol=1e-5, atol=1e-5), (result, ref)
    print("KERNEL_OK")
</pallas_src>

<mosaic_0001>
module attributes {stable_mosaic.version = 11 : i64} {
  func.func @kernel(%arg0: i32, %arg1: memref<16x64xf32, #tpu.memory_space<vmem>>, %arg2: memref<1x1x64xf32, #tpu.memory_space<vmem>>) attributes {dimension_semantics = [#tpu.dimension_semantics<parallel>], iteration_bounds = array<i64: 2>, scalar_prefetch = 0 : i64, scratch_operands = 0 : i64, tpu.core_type = #tpu.core_type<tc>, window_params = [{transform_indices = @transform_0, window_bounds = array<i64: 16, 64>}, {transform_indices = @transform_1, window_bounds = array<i64: 1, 1, 64>}]} {
    %c0 = arith.constant 0 : index
    %c0_0 = arith.constant 0 : index
    %0 = vector.load %arg1[%c0, %c0_0] : memref<16x64xf32, #tpu.memory_space<vmem>>, vector<16x64xf32>
    %1 = arith.mulf %0, %0 : vector<16x64xf32>
    %cst = arith.constant dense<0.000000e+00> : vector<64xf32>
    %2 = vector.multi_reduction <add>, %1, %cst [0] : vector<16x64xf32> to vector<64xf32>
    %3 = vector.shape_cast %2 : vector<64xf32> to vector<1x64xf32>
    %4 = vector.shape_cast %3 : vector<1x64xf32> to vector<1x1x64xf32>
    %c0_1 = arith.constant 0 : index
    %c0_2 = arith.constant 0 : index
    %c0_3 = arith.constant 0 : index
    %5 = vector.load %arg2[%c0_1, %c0_2, %c0_3] : memref<1x1x64xf32, #tpu.memory_space<vmem>>, vector<1x1x64xf32>
    tpu.vector_store %arg2[%c0_1, %c0_2, %c0_3], %4 {strides = array<i32>} : memref<1x1x64xf32, #tpu.memory_space<vmem>>, vector<1x1x64xf32>,
    return
  }
  func.func @transform_0(%arg0: i32) -> (i32, i32) {
    %c0_i32 = arith.constant 0 : i32
    %c0_i32_0 = arith.constant 0 : i32
    return %arg0, %c0_i32 : i32, i32
  }
  func.func @transform_1(%arg0: i32) -> (i32, i32, i32) {
    %c0_i32 = arith.constant 0 : i32
    %c0_i32_0 = arith.constant 0 : i32
    %c0_i32_1 = arith.constant 0 : i32
    return %arg0, %c0_i32, %c0_i32_0 : i32, i32, i32
  }
}

</mosaic_0001>

<llo_original>
// kernel: tpu_custom_call.1
$region0: #{tpu_custom_call.1}
  #allocation0 [shape = 'u32[]', space=smem, size = 0x4, offset = 0x4, fixed_abs, tag = 'smem constant byte address 0x4 - core index']
  #allocation1 [shape = 'u32[144,128]{1,0:T(1,128)}', space=vmem, size = 0x12000, scoped, tag = 'internal scratch']
  %s0 = inlined_call_operand.hbm [shape: f32[32,64], index: 0, kind: input, shape index: {}]
  %s1 = inlined_call_operand.hbm [shape: f32[2,1,64], index: 1, kind: output, shape index: {}]
  %s2 = sld [smem:[#allocation0]]
  $region41: #{tpu_custom_call.1} parent=0
    _
  %s4 = ssub.s32 1, %s2
  %s5 = scalar_select 0, %s4, %s2
  $region1: #{tpu_custom_call.1} parent=0
    #allocation2 [shape = 'u8[16384]{0}', space=vmem, size = 0x4000, scoped, tag = 'input window, operand 0']
    #allocation3 [shape = 's32[2]{0}', space=sflag, size = 0x8, scoped, tag = 'scoped memory for tpu_custom_call.1']
    #allocation4 [shape = 's32[2]{0}', space=sflag, size = 0x8, scoped, tag = 'scoped memory for tpu_custom_call.1']
    #allocation5 [shape = 'u8[1024]{0}', space=vmem, size = 0x400, scoped, tag = 'output window, operand 0']
    %6 = vsyncpa [#allocation3], 0
    %s7 = scalar_lea.sflag [#allocation3], 1
    %8 = vsyncpa %s7, 0
    %9 = vsyncpa [#allocation4], 0
    %s10 = scalar_lea.sflag [#allocation4], 1
    %11 = vsyncpa %s10, 0
    loop: start=0, step=1, limit=4
    $region2: #{tpu_custom_call.1} parent=1 // loop_pre_header
      _
    $region3: #{tpu_custom_call.1} parent=1 // loop_header
      %s13 = sphi 0, %s17
      %p14 = scmp.ge.s32.totalorder %s13, 4
      %s23 = sphi 0, %s25
      %s26 = sphi 0, %s23
      %s27 = sphi 0, %s26
      %s43 = sphi 0, %s27
      %s49 = sphi 0, %s51
      %s52 = sphi 0, %s49
      %s53 = sphi 0, %s52
      %s69 = sphi 0, %s53
    $region4: #{tpu_custom_call.1} parent=1 // loop_header_branch
      %16 = sbr.rel (%p14) target = $region8
    $region5: #{tpu_custom_call.1} parent=1 // loop_body
      %s18 = ssub.s32 %s13, 1
      %s19 = ssub.s32 %s13, 2
      %s20 = sadd.s32 %s13, 1
      %s21 = ssub.s32 %s13, %s20
      %p22 = scmp.eq.s32.totalorder %s21, 0
      %s24 = sadd.s32 %s23, 1
      %s25 = scalar_select %p22, %s23, %s24
      %p28 = pneg %p22
      %p29 = scmp.eq.s32.totalorder %s13, 1
      %p30 = por %p28, %p29
      %p31 = scmp.ne.s32.totalorder %s23, %s26
      %p32 = scmp.eq.s32.totalorder %s13, 0
      %p33 = por %p31, %p32
      %p34 = scmp.ne.s32.totalorder %s23, %s26
      %p35 = scmp.eq.s32.totalorder %s18, 1
      %p36 = por %p34, %p35
      %p37 = scmp.ne.s32.totalorder %s26, %s27
      %p38 = scmp.eq.s32.totalorder %s18, 0
      %p39 = por %p37, %p38
      %p40 = scmp.ne.s32.totalorder %s26, %s27
      %p41 = scmp.eq.s32.totalorder %s19, 1
      %p42 = por %p40, %p41
      %p44 = scmp.ne.s32.totalorder %s27, %s43
      %p45 = scmp.eq.s32.totalorder %s19, 0
      %p46 = por %p44, %p45
      %s47 = ssub.s32 %s13, %s20
      %p48 = scmp.eq.s32.totalorder %s47, 0
      %s50 = sadd.s32 %s49, 1
      %s51 = scalar_select %p48, %s49, %s50
      %p54 = pneg %p48
      %p55 = scmp.eq.s32.totalorder %s13, 1
      %p56 = por %p54, %p55
      %p57 = scmp.ne.s32.totalorder %s49, %s52
      %p58 = scmp.eq.s32.totalorder %s13, 0
      %p59 = por %p57, %p58
      %p60 = scmp.ne.s32.totalorder %s49, %s52
      %p61 = scmp.eq.s32.totalorder %s18, 1
      %p62 = por %p60, %p61
      %p63 = scmp.ne.s32.totalorder %s52, %s53
      %p64 = scmp.eq.s32.totalorder %s18, 0
      %p65 = por %p63, %p64
      %p66 = scmp.ne.s32.totalorder %s52, %s53
      %p67 = scmp.eq.s32.totalorder %s19, 1
      %p68 = por %p66, %p67
      %p70 = scmp.ne.s32.totalorder %s53, %s69
      %p71 = scmp.eq.s32.totalorder %s19, 0
      %p72 = por %p70, %p71
      %p73 = scmp.le.s32.totalorder 1, %s13
      %p74 = scmp.lt.s32.totalorder %s13, 3
      %p75 = pnand %p73, %p74
      %p76 = pneg %p75
      // Predicated region
      $region9: #{tpu_custom_call.1} parent=5 // pred_check
        _
      $region10: #{tpu_custom_call.1} parent=5 // pred_check_branch
        %78 = sbr.rel (%p75) target = $region12
      $region11: #{tpu_custom_call.1} parent=5 // pred_region
        %s79 = ssub.s32 %s13, 1
      $region12: #{tpu_custom_call.1} parent=5 // pred_fallthru
        _
      %p80 = scmp.lt.s32.totalorder %s13, 2
      // Predicated region
      $region13: #{tpu_custom_call.1} parent=5 // pred_check
        %p81 = pneg %p80
      $region14: #{tpu_custom_call.1} parent=5 // pred_check_branch
        %83 = sbr.rel (%p81) target = $region16
      $region15: #{tpu_custom_call.1} parent=5 // pred_region
        // Predicated region
        $region17: #{tpu_custom_call.1} parent=15 // pred_check
          %p84 = pneg %p33
        $region18: #{tpu_custom_call.1} parent=15 // pred_check_branch
          %86 = sbr.rel (%p84) target = $region20
        $region19: #{tpu_custom_call.1} parent=15 // pred_region
          %s87 = sand.u32 %s23, 1
          %s88 = scalar_lea.sflag [#allocation3], %s87
          %s89 = sand.u32 %s23, 1
          %s90 = smul.addr %s89, 16
          %s91 = scalar_lea.vmem [#allocation2], %s90
          %s92 = smul.u32 2, %s13
          %s94 = ssub.s32 256, 256
          %95 = vsyncadd %s88, %s94
          %s96 = smul.addr %s92, 128
          %s97 = scalar_lea.hbm %s0, %s96
          %s98 = sshll.u32 %s91, 4
          %s99 = int_to_ptr.vmem [resolvable:$true] %s98
          %104 = dma.hbm_to_vmem [thread:$0]  %s97, 256, %s99, %s88, 128, 128, 8
        $region20: #{tpu_custom_call.1} parent=15 // pred_fallthru
          _
      $region16: #{tpu_custom_call.1} parent=5 // pred_fallthru
        _
      %p105 = scmp.le.s32.totalorder 1, %s13
      %p106 = scmp.lt.s32.totalorder %s13, 3
      %p107 = pnand %p105, %p106
      %p108 = pneg %p107
      // Predicated region
      $region21: #{tpu_custom_call.1} parent=5 // pred_check
        _
      $region22: #{tpu_custom_call.1} parent=5 // pred_check_branch
        %110 = sbr.rel (%p107) target = $region24
      $region23: #{tpu_custom_call.1} parent=5 // pred_region
        %s111 = ssub.s32 %s13, 1
        %s112 = sand.u32 %s26, 1
        %s113 = scalar_lea.sflag [#allocation3], %s112
        %s114 = sand.u32 %s26, 1
        %s115 = smul.addr %s114, 16
        %s116 = scalar_lea.vmem [#allocation2], %s115
        // Predicated region
        $region25: #{tpu_custom_call.1} parent=23 // pred_check
          %p117 = pneg %p39
        $region26: #{tpu_custom_call.1} parent=23 // pred_check_branch
          %119 = sbr.rel (%p117) target = $region28
        $region27: #{tpu_custom_call.1} parent=23 // pred_region
          %120 = dma.done %s113, 256
        $region28: #{tpu_custom_call.1} parent=23 // pred_fallthru
          _
        %s121 = sand.u32 %s26, 1
        %s122 = scalar_lea.sflag [#allocation3], %s121
        %s123 = sand.u32 %s26, 1
        %s124 = smul.addr %s123, 16
        %s125 = scalar_lea.vmem [#allocation2], %s124
        %p126 = pneg %p39
        %p127 = pneg %p36
        %p128 = pneg %p65
        %p129 = pneg %p62
        %s130 = sand.u32 %s52, 1
        %s131 = scalar_lea.sflag [#allocation4], %s130
        %s132 = sand.u32 %s52, 1
        %s133 = scalar_lea.vmem [#allocation5], %s132
        %s134 = smul.u32 2, %s18
        %v135 = vld [vmem:[%s116] sm:$0xff]
        %v136 = vld [vmem:[%s116 + $0x8] sm:$0xff]
        %v137 = vmul.f32 %v135, %v135
        %v138 = vmul.f32 %v136, %v136
        %vm139 = vcmask 523264
        %v140 = vsel %vm139, %v137, 0.0
        %v141 = vsel %vm139, %v138, 0.0
        %v142 = vadd.f32 %v140, %v141
        %v143 = vrot.slane %v142, 4
        %v144 = vadd.f32 %v142, %v143
        %v145 = vrot.slane %v144, 2
        %v146 = vadd.f32 %v144, %v145
        %v147 = vrot.slane %v146, 1
        %v148 = vadd.f32 %v146, %v147
        %vm149 = vcmask 516096
        %150 = vst.msk [vmem:[%s133] sm:$0x1] %vm149, %v148
        %s151 = sand.u32 %s52, 1
        %s152 = scalar_lea.sflag [#allocation4], %s151
        %s153 = sand.u32 %s52, 1
        %s154 = scalar_lea.vmem [#allocation5], %s153
        // Predicated region
        $region29: #{tpu_custom_call.1} parent=23 // pred_check
          %p155 = pneg %p62
        $region30: #{tpu_custom_call.1} parent=23 // pred_check_branch
          %157 = sbr.rel (%p155) target = $region32
        $region31: #{tpu_custom_call.1} parent=23 // pred_region
          %s159 = ssub.s32 16, 16
          %160 = vsyncadd %s152, %s159
          %s161 = smul.addr %s18, 16
          %s162 = scalar_lea.hbm %s1, %s161
          %s164 = sshll.u32 %s154, 4
          %s165 = int_to_ptr.vmem [resolvable:$true] %s164
          %167 = dma.vmem_to_hbm [thread:$0]  %s165, 16, %s162, %s152
        $region32: #{tpu_custom_call.1} parent=23 // pred_fallthru
          _
      $region24: #{tpu_custom_call.1} parent=5 // pred_fallthru
        _
      %p168 = scmp.le.s32.totalorder 2, %s13
      // Predicated region
      $region33: #{tpu_custom_call.1} parent=5 // pred_check
        %p169 = pneg %p168
      $region34: #{tpu_custom_call.1} parent=5 // pred_check_branch
        %171 = sbr.rel (%p169) target = $region36
      $region35: #{tpu_custom_call.1} parent=5 // pred_region
        %s172 = ssub.s32 %s13, 2
        // Predicated region
        $region37: #{tpu_custom_call.1} parent=35 // pred_check
          %p173 = pneg %p68
        $region38: #{tpu_custom_call.1} parent=35 // pred_check_branch
          %175 = sbr.rel (%p173) target = $region40
        $region39: #{tpu_custom_call.1} parent=35 // pred_region
          %s176 = sand.u32 %s53, 1
          %s177 = scalar_lea.sflag [#allocation4], %s176
          %s178 = sand.u32 %s53, 1
          %s179 = scalar_lea.vmem [#allocation5], %s178
          %180 = dma.done %s177, 16
        $region40: #{tpu_custom_call.1} parent=35 // pred_fallthru
          _
      $region36: #{tpu_custom_call.1} parent=5 // pred_fallthru
        _
    $region6: #{tpu_custom_call.1} parent=1 // loop_footer
      %s17 = sadd.s32 1, %s13
    $region7: #{tpu_custom_call.1} parent=1 // loop_footer_branch
      %12 = sbr.rel target = $region3
    $region8: #{tpu_custom_call.1} parent=1 // loop_exit
      _
    %181 = vsyncpa [#allocation3], 1
    %s182 = scalar_lea.sflag [#allocation3], 1
    %183 = vsyncpa %s182, 1
    %184 = vsyncpa [#allocation4], 1
    %s185 = scalar_lea.sflag [#allocation4], 1
    %186 = vsyncpa %s185, 1

</llo_original>
